<compile_context>
chip_gen: v7x
topology: tpu7x:2x2x1
jax: 0.10.0
libtpu: 0.0.40
codegen_flags: <defaults>
</compile_context>

<pallas_src>
import jax
import jax.numpy as jnp
import numpy as np
from jax import lax
from jax.experimental import pallas as pl
from jax.experimental.pallas import tpu as pltpu

EPS = 1e-5


def _banded_weight(w, W):
    """Fold a 3x3 conv (padding=1 along width) into a fused banded matmul weight.

    w: (3, 3, Cin, Cout) HWIO.  Returns (3*W*Cin, W*Cout) f32 where row block
    dy contains Wb[ki*Cin + ci, ko*Cout + co] = w[dy, dx, ci, co] iff
    ki == ko + dx - 1.  Out-of-range taps are absent == zero padding along W.

    TODO(synk): when Cout >= 128 fills the lane dim by itself, switch to
    K = 9*Cin im2col-over-channels; the banded form wastes ~W/3 MXU FLOPs and
    its weight VMEM grows as W^2*Cout^2.
    """
    ki = jnp.arange(W)
    ko = jnp.arange(W)
    dx = jnp.arange(3)
    ind = (ki[None, :, None] == (ko[None, None, :] + dx[:, None, None] - 1))
    ind = ind.astype(jnp.float32)                                  # (3, W, W)
    wb = jnp.einsum("xkw,yxio->ykiwo", ind, w.astype(jnp.float32))
    Cin, Cout = w.shape[2], w.shape[3]
    return wb.reshape(3 * W * Cin, W * Cout)


def conv_block_kernel(x_ref, wbf1_ref, g1_ref, be1_ref,
                      wbf2_ref, g2_ref, be2_ref, p_ref,
                      out_ref, xbuf_ref, hbuf_ref):
    """Fused (conv3x3 + BN + ReLU) x 2 in a lane-packed (rows, W*C) layout.

    x_ref    : (N, H, W*Cin)      unpadded input (halo added in-kernel)
    wbf*_ref : (3*K, W*Cout)      fused banded conv weights (K = W*Cin / W*Cout)
    g*/be*   : (1, W*Cout)        BN gamma/beta tiled across W
    p_ref    : (W*Cout, W*Cout)   channel projection / (N*H*W): per-channel
                                  mean reduce + lane broadcast as one matmul
    out_ref  : (N*H, W*Cout)      lane-dense output (128 lanes)
    xbuf_ref : (N, H+2, W*Cin)    VMEM scratch: input + H-halo rows
    hbuf_ref : (N, H+2, W*Cout)   VMEM scratch: layer-1 output + H-halo rows
    """
    N, H, Kin = x_ref.shape
    L = out_ref.shape[-1]

    def conv3x3(src_ref, wbf_ref):
        # Single MXU call per layer: the 3 dy taps are concatenated along the
        # contraction dim; dx taps and W zero-padding live inside the weight.
        k = src_ref.shape[-1]
        lhs = jnp.concatenate(
            [src_ref[:, dy:dy + H, :] for dy in range(3)], axis=-1
        ).reshape(N * H, 3 * k)
        # TODO(synk): if a scaled version becomes MXU-bound in f32, use the
        # split-f32-as-2xbf16 (bf16x3) trick here with f32 accumulation; plain
        # bf16 does not hold 1e-3 vs the f32 reference (BN rsqrt amplifies it).
        return jnp.dot(lhs, wbf_ref[...], preferred_element_type=jnp.float32)

    def bn_relu(acc, gamma_l, beta_l):
        # Train-mode BN: single-pass sum / sum-of-squares, biased variance.
        # Both channel reductions share ONE projection matmul (stacked rows).
        # TODO(synk): at larger scales switch to a shifted/two-pass variance to
        # avoid E[x^2]-mean^2 cancellation (post-ReLU activations have
        # |mean| >> std).
        s = jnp.sum(acc, axis=0, keepdims=True)                 # (1, L)
        sq = jnp.sum(acc * acc, axis=0, keepdims=True)          # (1, L)
        stats = jnp.concatenate([s, sq], axis=0)                # (2, L)
        red = jnp.dot(stats, p_ref[...],
                      preferred_element_type=jnp.float32)       # (2, L)
        mean = red[0:1, :]
        var = red[1:2, :] - mean * mean
        scale = gamma_l * lax.rsqrt(var + EPS)
        shift = beta_l - mean * scale
        return jnp.maximum(acc * scale + shift, 0.0)            # one FMA pass

    # ---- stage input with H-halo rows (replaces wrapper-side jnp.pad) ------
    xbuf_ref[:, 0:1, :] = jnp.zeros((N, 1, Kin), jnp.float32)
    xbuf_ref[:, H + 1:H + 2, :] = jnp.zeros((N, 1, Kin), jnp.float32)
    xbuf_ref[:, 1:1 + H, :] = x_ref[...]

    # ---- layer 1: conv + BN + ReLU (bias omitted: BN mean-subtract cancels it)
    h1 = bn_relu(conv3x3(xbuf_ref, wbf1_ref), g1_ref[...], be1_ref[...])

    # ---- re-stage intermediate with row halos only (no full memset) --------
    hbuf_ref[:, 0:1, :] = jnp.zeros((N, 1, L), jnp.float32)
    hbuf_ref[:, H + 1:H + 2, :] = jnp.zeros((N, 1, L), jnp.float32)
    hbuf_ref[:, 1:1 + H, :] = h1.reshape(N, H, L)               # 128-lane store

    # ---- layer 2 -----------------------------------------------------------
    h2 = bn_relu(conv3x3(hbuf_ref, wbf2_ref), g2_ref[...], be2_ref[...])
    out_ref[...] = h2.astype(out_ref.dtype)


@jax.jit
def conv_block_forward(x_nchw, w1, b1, g1, be1, w2, b2, g2, be2):
    """x_nchw: (N, Cin, H, W); w*: (3,3,Cin,Cout) HWIO. Returns NCHW f32.

    Conv biases b1/b2 are accepted for API parity but dropped: train-mode BN
    subtracts the per-channel mean right after the conv, so a per-channel bias
    is mathematically a no-op (validated against the biased reference below).
    """
    del b1, b2
    N, Cin, H, W = x_nchw.shape
    Cout = w1.shape[-1]
    Kin = W * Cin
    L = W * Cout

    # Single relayout NCHW -> (N, H, W*Cin); H-halo padding happens in-kernel.
    # TODO(synk): at production sizes fold this transpose into the input
    # BlockSpec/DMA (or accept NHWC input) and hand the consumer the
    # (N*H, W*Cout) / NHWC layout directly to avoid the output transpose too.
    x_act = jnp.transpose(x_nchw, (0, 2, 3, 1)).astype(jnp.float32)
    x_act = x_act.reshape(N, H, Kin)

    wbf1 = _banded_weight(w1, W)                   # (3*W*Cin,  W*Cout)
    wbf2 = _banded_weight(w2, W)                   # (3*W*Cout, W*Cout)

    tile = lambda v: jnp.tile(v.astype(jnp.float32), W).reshape(1, L)
    lane_c = jnp.arange(L) % Cout
    proj = (lane_c[:, None] == lane_c[None, :]).astype(jnp.float32)
    proj = proj / float(N * H * W)                 # fold 1/count into reduce

    # VMEM budget derived from the actual buffer sizes (x4 headroom for kernel
    # intermediates such as the fused conv LHS), instead of a fixed number —
    # valid on v5e (16 MiB scoped default) and v7x (64 MiB physical) alike.
    buf_elems = (x_act.size + wbf1.size + wbf2.size + proj.size
                 + 4 * L                     # gamma/beta tiles
                 + N * H * L                 # output
                 + N * (H + 2) * Kin         # xbuf scratch
                 + N * (H + 2) * L)          # hbuf scratch
    vmem_limit = max(4 * 1024 * 1024, int(4 * 4 * buf_elems))

    # TODO(synk): for shapes exceeding VMEM, add a grid over (N, H-row-blocks)
    # with dimension_semantics=("parallel", "arbitrary") so v7x's 2 TensorCores
    # both work and DMA overlaps compute (constant index_map keeps the banded
    # weights resident); train-mode BN then needs the two-phase scheme
    # (per-tile sum/sumsq accumulators + a normalization pass) because the
    # statistics are global.  On v6e/v7x pick >=256-lane / >=256-row tiles
    # (2x256x256 MXU); 128-wide tiles only match v5e.  At these demo shapes the
    # whole problem (< 0.5 MiB) is VMEM-resident in one invocation.
    vmem = pl.BlockSpec(memory_space=pltpu.MemorySpace.VMEM)
    out = pl.pallas_call(
        conv_block_kernel,
        out_shape=jax.ShapeDtypeStruct((N * H, L), jnp.float32),
        in_specs=[vmem] * 8,
        out_specs=vmem,
        scratch_shapes=[pltpu.VMEM((N, H + 2, Kin), jnp.float32),
                        pltpu.VMEM((N, H + 2, L), jnp.float32)],
        compiler_params=pltpu.CompilerParams(vmem_limit_bytes=vmem_limit),
    )(x_act, wbf1, tile(g1), tile(be1), wbf2, tile(g2), tile(be2), proj)

    # (N*H, W*Cout) -> NCHW
    return jnp.transpose(out.reshape(N, H, W, Cout), (0, 3, 1, 2))


def _reference(x_nchw, w1, b1, g1, be1, w2, b2, g2, be2):
    """Pure-JAX reference (train-mode BN, biases included) for validation."""
    x = jnp.transpose(x_nchw, (0, 2, 3, 1)).astype(jnp.float32)

    def block(x, w, b, g, be):
        y = lax.conv_general_dilated(
            x, w, window_strides=(1, 1), padding=((1, 1), (1, 1)),
            dimension_numbers=("NHWC", "HWIO", "NHWC"))
        y = y + b[None, None, None, :]
        mean = jnp.mean(y, axis=(0, 1, 2), keepdims=True)
        var = jnp.mean((y - mean) ** 2, axis=(0, 1, 2), keepdims=True)
        y = (y - mean) * lax.rsqrt(var + EPS)
        y = y * g[None, None, None, :] + be[None, None, None, :]
        return jnp.maximum(y, 0.0)

    y = block(x, w1, b1, g1, be1)
    y = block(y, w2, b2, g2, be2)
    return jnp.transpose(y, (0, 3, 1, 2))


if __name__ == "__main__":
    N, C_IN, C_OUT, H, W = 2, 4, 8, 16, 16

    key = jax.random.PRNGKey(0)
    ks = jax.random.split(key, 7)
    x = jax.random.normal(ks[0], (N, C_IN, H, W), jnp.float32)

    # Deterministic synthetic parameters (shapes match nn.Conv2d/BatchNorm2d).
    fan1 = C_IN * 9
    w1 = jax.random.normal(ks[1], (3, 3, C_IN, C_OUT), jnp.float32) / np.sqrt(fan1)
    b1 = jax.random.normal(ks[2], (C_OUT,), jnp.float32) * 0.1
    fan2 = C_OUT * 9
    w2 = jax.random.normal(ks[3], (3, 3, C_OUT, C_OUT), jnp.float32) / np.sqrt(fan2)
    b2 = jax.random.normal(ks[4], (C_OUT,), jnp.float32) * 0.1
    # BatchNorm affine params (PyTorch default init is gamma=1, beta=0;
    # perturbed slightly here to exercise the scale/shift path).
    g1 = 1.0 + 0.1 * jax.random.normal(ks[5], (C_OUT,), jnp.float32)
    be1 = jnp.zeros((C_OUT,), jnp.float32)
    g2 = 1.0 + 0.1 * jax.random.normal(ks[6], (C_OUT,), jnp.float32)
    be2 = jnp.zeros((C_OUT,), jnp.float32)

    y = conv_block_forward(x, w1, b1, g1, be1, w2, b2, g2, be2)
    y = jax.block_until_ready(y)

    y_ref = _reference(x, w1, b1, g1, be1, w2, b2, g2, be2)
    assert y.shape == (N, C_OUT, H, W)
    np.testing.assert_allclose(np.asarray(y), np.asarray(y_ref),
                               rtol=1e-3, atol=1e-3)

    print("KERNEL_OK")
</pallas_src>

<mosaic_0001>
module attributes {stable_mosaic.version = 11 : i64} {
  func.func @conv_block_kernel(%arg0: memref<2x16x64xf32, #tpu.memory_space<vmem>>, %arg1: memref<192x128xf32, #tpu.memory_space<vmem>>, %arg2: memref<1x128xf32, #tpu.memory_space<vmem>>, %arg3: memref<1x128xf32, #tpu.memory_space<vmem>>, %arg4: memref<384x128xf32, #tpu.memory_space<vmem>>, %arg5: memref<1x128xf32, #tpu.memory_space<vmem>>, %arg6: memref<1x128xf32, #tpu.memory_space<vmem>>, %arg7: memref<128x128xf32, #tpu.memory_space<vmem>>, %arg8: memref<32x128xf32, #tpu.memory_space<vmem>>, %arg9: memref<2x18x64xf32, #tpu.memory_space<vmem>>, %arg10: memref<2x18x128xf32, #tpu.memory_space<vmem>>) attributes {dimension_semantics = [], scalar_prefetch = 0 : i64, scratch_operands = 2 : i64, tpu.core_type = #tpu.core_type<tc>} {
    %cst = arith.constant 0.000000e+00 : f32
    %0 = vector.broadcast %cst : f32 to vector<2x1x64xf32>
    %c0 = arith.constant 0 : index
    %c0_0 = arith.constant 0 : index
    %c0_1 = arith.constant 0 : index
    %1 = vector.load %arg9[%c0, %c0_0, %c0_1] : memref<2x18x64xf32, #tpu.memory_space<vmem>>, vector<2x1x64xf32>
    tpu.vector_store %arg9[%c0, %c0_0, %c0_1], %0 {strides = array<i32>} : memref<2x18x64xf32, #tpu.memory_space<vmem>>, vector<2x1x64xf32>,
    %cst_2 = arith.constant 0.000000e+00 : f32
    %2 = vector.broadcast %cst_2 : f32 to vector<2x1x64xf32>
    %c0_3 = arith.constant 0 : index
    %c17 = arith.constant 17 : index
    %c0_4 = arith.constant 0 : index
    %3 = vector.load %arg9[%c0_3, %c17, %c0_4] : memref<2x18x64xf32, #tpu.memory_space<vmem>>, vector<2x1x64xf32>
    tpu.vector_store %arg9[%c0_3, %c17, %c0_4], %2 {strides = array<i32>} : memref<2x18x64xf32, #tpu.memory_space<vmem>>, vector<2x1x64xf32>,
    %c0_5 = arith.constant 0 : index
    %c0_6 = arith.constant 0 : index
    %c0_7 = arith.constant 0 : index
    %4 = vector.load %arg0[%c0_5, %c0_6, %c0_7] : memref<2x16x64xf32, #tpu.memory_space<vmem>>, vector<2x16x64xf32>
    %c0_8 = arith.constant 0 : index
    %c1 = arith.constant 1 : index
    %c0_9 = arith.constant 0 : index
    %5 = vector.load %arg9[%c0_8, %c1, %c0_9] : memref<2x18x64xf32, #tpu.memory_space<vmem>>, vector<2x16x64xf32>
    tpu.vector_store %arg9[%c0_8, %c1, %c0_9], %4 {strides = array<i32>} : memref<2x18x64xf32, #tpu.memory_space<vmem>>, vector<2x16x64xf32>,
    %c0_10 = arith.constant 0 : index
    %c0_11 = arith.constant 0 : index
    %c0_12 = arith.constant 0 : index
    %6 = vector.load %arg9[%c0_10, %c0_11, %c0_12] : memref<2x18x64xf32, #tpu.memory_space<vmem>>, vector<2x16x64xf32>
    %c0_13 = arith.constant 0 : index
    %c1_14 = arith.constant 1 : index
    %c0_15 = arith.constant 0 : index
    %7 = vector.load %arg9[%c0_13, %c1_14, %c0_15] : memref<2x18x64xf32, #tpu.memory_space<vmem>>, vector<2x16x64xf32>
    %c0_16 = arith.constant 0 : index
    %c2 = arith.constant 2 : index
    %c0_17 = arith.constant 0 : index
    %8 = vector.load %arg9[%c0_16, %c2, %c0_17] : memref<2x18x64xf32, #tpu.memory_space<vmem>>, vector<2x16x64xf32>
    %9 = tpu.concatenate %6, %7, %8 in 2 : vector<2x16x64xf32>, vector<2x16x64xf32>, vector<2x16x64xf32> -> vector<2x16x192xf32>
    %10 = vector.shape_cast %9 : vector<2x16x192xf32> to vector<32x192xf32>
    %c0_18 = arith.constant 0 : index
    %c0_19 = arith.constant 0 : index
    %11 = vector.load %arg1[%c0_18, %c0_19] : memref<192x128xf32, #tpu.memory_space<vmem>>, vector<192x128xf32>
    %cst_20 = arith.constant dense<0.000000e+00> : vector<32x128xf32>
    %12 = tpu.matmul %10, %11, %cst_20 {dimension_numbers = #tpu.dot_dimension_numbers<[1], [0], [0], [1], [0, 0, 1, 1], [], []>} : vector<32x192xf32>, vector<192x128xf32>, vector<32x128xf32> -> vector<32x128xf32>
    %c0_21 = arith.constant 0 : index
    %c0_22 = arith.constant 0 : index
    %13 = vector.load %arg2[%c0_21, %c0_22] : memref<1x128xf32, #tpu.memory_space<vmem>>, vector<1x128xf32>
    %c0_23 = arith.constant 0 : index
    %c0_24 = arith.constant 0 : index
    %14 = vector.load %arg3[%c0_23, %c0_24] : memref<1x128xf32, #tpu.memory_space<vmem>>, vector<1x128xf32>
    %cst_25 = arith.constant dense<0.000000e+00> : vector<128xf32>
    %15 = vector.multi_reduction <add>, %12, %cst_25 [0] : vector<32x128xf32> to vector<128xf32>
    %16 = vector.shape_cast %15 : vector<128xf32> to vector<1x128xf32>
    %17 = arith.mulf %12, %12 : vector<32x128xf32>
    %cst_26 = arith.constant dense<0.000000e+00> : vector<128xf32>
    %18 = vector.multi_reduction <add>, %17, %cst_26 [0] : vector<32x128xf32> to vector<128xf32>
    %19 = vector.shape_cast %18 : vector<128xf32> to vector<1x128xf32>
    %20 = tpu.concatenate %16, %19 in 0 : vector<1x128xf32>, vector<1x128xf32> -> vector<2x128xf32>
    %c0_27 = arith.constant 0 : index
    %c0_28 = arith.constant 0 : index
    %21 = vector.load %arg7[%c0_27, %c0_28] : memref<128x128xf32, #tpu.memory_space<vmem>>, vector<128x128xf32>
    %cst_29 = arith.constant dense<0.000000e+00> : vector<2x128xf32>
    %22 = tpu.matmul %20, %21, %cst_29 {dimension_numbers = #tpu.dot_dimension_numbers<[1], [0], [0], [1], [0, 0, 1, 1], [], []>} : vector<2x128xf32>, vector<128x128xf32>, vector<2x128xf32> -> vector<2x128xf32>
    %23 = vector.extract_strided_slice %22 {offsets = [0, 0], sizes = [1, 128], strides = [1, 1]} : vector<2x128xf32> to vector<1x128xf32>
    %24 = vector.extract_strided_slice %22 {offsets = [1, 0], sizes = [1, 128], strides = [1, 1]} : vector<2x128xf32> to vector<1x128xf32>
    %25 = arith.mulf %23, %23 : vector<1x128xf32>
    %26 = arith.subf %24, %25 : vector<1x128xf32>
    %cst_30 = arith.constant 9.99999974E-6 : f32
    %27 = vector.broadcast %cst_30 : f32 to vector<1x128xf32>
    %28 = arith.addf %26, %27 : vector<1x128xf32>
    %29 = math.rsqrt %28 : vector<1x128xf32>
    %30 = arith.mulf %13, %29 : vector<1x128xf32>
    %31 = arith.mulf %23, %30 : vector<1x128xf32>
    %32 = arith.subf %14, %31 : vector<1x128xf32>
    %33 = vector.broadcast %30 : vector<1x128xf32> to vector<32x128xf32>
    %34 = arith.mulf %12, %33 : vector<32x128xf32>
    %35 = vector.broadcast %32 : vector<1x128xf32> to vector<32x128xf32>
    %36 = arith.addf %34, %35 : vector<32x128xf32>
    %cst_31 = arith.constant 0.000000e+00 : f32
    %37 = vector.broadcast %cst_31 : f32 to vector<32x128xf32>
    %38 = arith.maximumf %36, %37 : vector<32x128xf32>
    %cst_32 = arith.constant 0.000000e+00 : f32
    %39 = vector.broadcast %cst_32 : f32 to vector<2x1x128xf32>
    %c0_33 = arith.constant 0 : index
    %c0_34 = arith.constant 0 : index
    %c0_35 = arith.constant 0 : index
    %40 = vector.load %arg10[%c0_33, %c0_34, %c0_35] : memref<2x18x128xf32, #tpu.memory_space<vmem>>, vector<2x1x128xf32>
    tpu.vector_store %arg10[%c0_33, %c0_34, %c0_35], %39 {strides = array<i32>} : memref<2x18x128xf32, #tpu.memory_space<vmem>>, vector<2x1x128xf32>,
    %cst_36 = arith.constant 0.000000e+00 : f32
    %41 = vector.broadcast %cst_36 : f32 to vector<2x1x128xf32>
    %c0_37 = arith.constant 0 : index
    %c17_38 = arith.constant 17 : index
    %c0_39 = arith.constant 0 : index
    %42 = vector.load %arg10[%c0_37, %c17_38, %c0_39] : memref<2x18x128xf32, #tpu.memory_space<vmem>>, vector<2x1x128xf32>
    tpu.vector_store %arg10[%c0_37, %c17_38, %c0_39], %41 {strides = array<i32>} : memref<2x18x128xf32, #tpu.memory_space<vmem>>, vector<2x1x128xf32>,
    %43 = vector.shape_cast %38 : vector<32x128xf32> to vector<2x16x128xf32>
    %c0_40 = arith.constant 0 : index
    %c1_41 = arith.constant 1 : index
    %c0_42 = arith.constant 0 : index
    %44 = vector.load %arg10[%c0_40, %c1_41, %c0_42] : memref<2x18x128xf32, #tpu.memory_space<vmem>>, vector<2x16x128xf32>
    tpu.vector_store %arg10[%c0_40, %c1_41, %c0_42], %43 {strides = array<i32>} : memref<2x18x128xf32, #tpu.memory_space<vmem>>, vector<2x16x128xf32>,
    %c0_43 = arith.constant 0 : index
    %c0_44 = arith.constant 0 : index
    %c0_45 = arith.constant 0 : index
    %45 = vector.load %arg10[%c0_43, %c0_44, %c0_45] : memref<2x18x128xf32, #tpu.memory_space<vmem>>, vector<2x16x128xf32>
    %c0_46 = arith.constant 0 : index
    %c1_47 = arith.constant 1 : index
    %c0_48 = arith.constant 0 : index
    %46 = vector.load %arg10[%c0_46, %c1_47, %c0_48] : memref<2x18x128xf32, #tpu.memory_space<vmem>>, vector<2x16x128xf32>
    %c0_49 = arith.constant 0 : index
    %c2_50 = arith.constant 2 : index
    %c0_51 = arith.constant 0 : index
    %47 = vector.load %arg10[%c0_49, %c2_50, %c0_51] : memref<2x18x128xf32, #tpu.memory_space<vmem>>, vector<2x16x128xf32>
    %48 = tpu.concatenate %45, %46, %47 in 2 : vector<2x16x128xf32>, vector<2x16x128xf32>, vector<2x16x128xf32> -> vector<2x16x384xf32>
    %49 = vector.shape_cast %48 : vector<2x16x384xf32> to vector<32x384xf32>
    %c0_52 = arith.constant 0 : index
    %c0_53 = arith.constant 0 : index
    %50 = vector.load %arg4[%c0_52, %c0_53] : memref<384x128xf32, #tpu.memory_space<vmem>>, vector<384x128xf32>
    %cst_54 = arith.constant dense<0.000000e+00> : vector<32x128xf32>
    %51 = tpu.matmul %49, %50, %cst_54 {dimension_numbers = #tpu.dot_dimension_numbers<[1], [0], [0], [1], [0, 0, 1, 1], [], []>} : vector<32x384xf32>, vector<384x128xf32>, vector<32x128xf32> -> vector<32x128xf32>
    %c0_55 = arith.constant 0 : index
    %c0_56 = arith.constant 0 : index
    %52 = vector.load %arg5[%c0_55, %c0_56] : memref<1x128xf32, #tpu.memory_space<vmem>>, vector<1x128xf32>
    %c0_57 = arith.constant 0 : index
    %c0_58 = arith.constant 0 : index
    %53 = vector.load %arg6[%c0_57, %c0_58] : memref<1x128xf32, #tpu.memory_space<vmem>>, vector<1x128xf32>
    %cst_59 = arith.constant dense<0.000000e+00> : vector<128xf32>
    %54 = vector.multi_reduction <add>, %51, %cst_59 [0] : vector<32x128xf32> to vector<128xf32>
    %55 = vector.shape_cast %54 : vector<128xf32> to vector<1x128xf32>
    %56 = arith.mulf %51, %51 : vector<32x128xf32>
    %cst_60 = arith.constant dense<0.000000e+00> : vector<128xf32>
    %57 = vector.multi_reduction <add>, %56, %cst_60 [0] : vector<32x128xf32> to vector<128xf32>
    %58 = vector.shape_cast %57 : vector<128xf32> to vector<1x128xf32>
    %59 = tpu.concatenate %55, %58 in 0 : vector<1x128xf32>, vector<1x128xf32> -> vector<2x128xf32>
    %c0_61 = arith.constant 0 : index
    %c0_62 = arith.constant 0 : index
    %60 = vector.load %arg7[%c0_61, %c0_62] : memref<128x128xf32, #tpu.memory_space<vmem>>, vector<128x128xf32>
    %cst_63 = arith.constant dense<0.000000e+00> : vector<2x128xf32>
    %61 = tpu.matmul %59, %60, %cst_63 {dimension_numbers = #tpu.dot_dimension_numbers<[1], [0], [0], [1], [0, 0, 1, 1], [], []>} : vector<2x128xf32>, vector<128x128xf32>, vector<2x128xf32> -> vector<2x128xf32>
    %62 = vector.extract_strided_slice %61 {offsets = [0, 0], sizes = [1, 128], strides = [1, 1]} : vector<2x128xf32> to vector<1x128xf32>
    %63 = vector.extract_strided_slice %61 {offsets = [1, 0], sizes = [1, 128], strides = [1, 1]} : vector<2x128xf32> to vector<1x128xf32>
    %64 = arith.mulf %62, %62 : vector<1x128xf32>
    %65 = arith.subf %63, %64 : vector<1x128xf32>
    %cst_64 = arith.constant 9.99999974E-6 : f32
    %66 = vector.broadcast %cst_64 : f32 to vector<1x128xf32>
    %67 = arith.addf %65, %66 : vector<1x128xf32>
    %68 = math.rsqrt %67 : vector<1x128xf32>
    %69 = arith.mulf %52, %68 : vector<1x128xf32>
    %70 = arith.mulf %62, %69 : vector<1x128xf32>
    %71 = arith.subf %53, %70 : vector<1x128xf32>
    %72 = vector.broadcast %69 : vector<1x128xf32> to vector<32x128xf32>
    %73 = arith.mulf %51, %72 : vector<32x128xf32>
    %74 = vector.broadcast %71 : vector<1x128xf32> to vector<32x128xf32>
    %75 = arith.addf %73, %74 : vector<32x128xf32>
    %cst_65 = arith.constant 0.000000e+00 : f32
    %76 = vector.broadcast %cst_65 : f32 to vector<32x128xf32>
    %77 = arith.maximumf %75, %76 : vector<32x128xf32>
    %c0_66 = arith.constant 0 : index
    %c0_67 = arith.constant 0 : index
    %78 = vector.load %arg8[%c0_66, %c0_67] : memref<32x128xf32, #tpu.memory_space<vmem>>, vector<32x128xf32>
    tpu.vector_store %arg8[%c0_66, %c0_67], %77 {strides = array<i32>} : memref<32x128xf32, #tpu.memory_space<vmem>>, vector<32x128xf32>,
    return
  }
}

</mosaic_0001>

<llo_original>
// kernel: tile.23
$region0: #{tile.23}
  #allocation0 [shape = 's32[1]{0}', space=sflag, size = 0x4, scoped, tag = 'scoped memory for tile.23']
  %s0 = inlined_call_operand.vmem [shape: f32[8], index: 0, kind: input, shape index: {}]
  %s1 = inlined_call_operand.vmem [shape: f32[16,8], index: 1, kind: output, shape index: {}]
  // Predicated region
  $region2: #{tile.23} parent=0 // pred_check
    _
  $region3: #{tile.23} parent=0 // pred_check_branch
    %3 = sbr.rel (0) target = $region5
  $region4: #{tile.23} parent=0 // pred_region
    _
  $region5: #{tile.23} parent=0 // pred_fallthru
    _
  %v4 = vld [vmem:[%s0] ss:$0 sm:$0xff]
  %5 = vst [vmem:[%s1] sm:$0xff] %v4
  %s6 = scalar_lea.vmem %s1, 8
  %7 = vst [vmem:[%s6] sm:$0xff] %v4

// kernel: tile.24
$region0: #{tile.24}
  %s0 = inlined_call_operand.vmem [shape: f32[16,8], index: 0, kind: input, shape index: {}]
  %s1 = inlined_call_operand.vmem [shape: f32[1,128], index: 1, kind: output, shape index: {}]
  $region1: #{tile.24} parent=0
    #allocation0 [shape = 'u8[4096]{0}', space=vmem, size = 0x1000, scoped, tag = 'scoped mem for output reshape']
    %v2 = vld [vmem:[%s0] sm:$0x1]
    %vm3 = vcmask 64512
    %4 = vst.msk [vmem:[#allocation0] sm:$0x1] %vm3, %v2
    %s5 = scalar_lea.vmem %s0, 15
    %v6 = vld [vmem:[%s5] sm:$0x1]
    %7 = vrot.lane.b32.xlu0 %v6, 120
    %v8 = vpop.permute.xlu0 %7
    %vm9 = vcmask 1048512
    %10 = vst.msk [vmem:[#allocation0] sm:$0x1] %vm9, %v8
    %s11 = scalar_lea.vmem %s0, 14
    %v12 = vld [vmem:[%s11] sm:$0x1]
    %13 = vrot.lane.b32.xlu0 %v12, 112
    %v14 = vpop.permute.xlu0 %13
    %vm15 = vcmask 982912
    %16 = vst.msk [vmem:[#allocation0] sm:$0x1] %vm15, %v14
    %s17 = scalar_lea.vmem %s0, 13
    %v18 = vld [vmem:[%s17] sm:$0x1]
    %19 = vrot.lane.b32.xlu0 %v18, 104
    %v20 = vpop.permute.xlu0 %19
    %vm21 = vcmask 917312
    %22 = vst.msk [vmem:[#allocation0] sm:$0x1] %vm21, %v20
    %s23 = scalar_lea.vmem %s0, 12
    %v24 = vld [vmem:[%s23] sm:$0x1]
    %25 = vrot.lane.b32.xlu0 %v24, 96
    %v26 = vpop.permute.xlu0 %25
    %vm27 = vcmask 851712
    %28 = vst.msk [vmem:[#allocation0] sm:$0x1] %vm27, %v26
    %s29 = scalar_lea.vmem %s0, 11
    %v30 = vld [vmem:[%s29] sm:$0x1]
    %31 = vrot.lane.b32.xlu0 %v30, 88
    %v32 = vpop.permute.xlu0 %31
    %vm33 = vcmask 786112
    %34 = vst.msk [vmem:[#allocation0] sm:$0x1] %vm33, %v32
    %s35 = scalar_lea.vmem %s0, 10
    %v36 = vld [vmem:[%s35] sm:$0x1]
    %37 = vrot.lane.b32.xlu0 %v36, 80
    %v38 = vpop.permute.xlu0 %37
    %vm39 = vcmask 720512
    %40 = vst.msk [vmem:[#allocation0] sm:$0x1] %vm39, %v38
    %s41 = scalar_lea.vmem %s0, 9
    %v42 = vld [vmem:[%s41] sm:$0x1]
    %43 = vrot.lane.b32.xlu0 %v42, 72
    %v44 = vpop.permute.xlu0 %43
    %vm45 = vcmask 654912
    %46 = vst.msk [vmem:[#allocation0] sm:$0x1] %vm45, %v44
    %s47 = scalar_lea.vmem %s0, 8
    %v48 = vld [vmem:[%s47] sm:$0x1]
    %49 = vrot.lane.b32.xlu0 %v48, 64
    %v50 = vpop.permute.xlu0 %49
    %vm51 = vcmask 589312
    %52 = vst.msk [vmem:[#allocation0] sm:$0x1] %vm51, %v50
    %s53 = scalar_lea.vmem %s0, 7
    %v54 = vld [vmem:[%s53] sm:$0x1]
    %55 = vrot.lane.b32.xlu0 %v54, 56
    %v56 = vpop.permute.xlu0 %55
    %vm57 = vcmask 523712
    %58 = vst.msk [vmem:[#allocation0] sm:$0x1] %vm57, %v56
    %s59 = scalar_lea.vmem %s0, 6
    %v60 = vld [vmem:[%s59] sm:$0x1]
    %61 = vrot.lane.b32.xlu0 %v60, 48
    %v62 = vpop.permute.xlu0 %61
    %vm63 = vcmask 458112
    %64 = vst.msk [vmem:[#allocation0] sm:$0x1] %vm63, %v62
    %s65 = scalar_lea.vmem %s0, 5
    %v66 = vld [vmem:[%s65] sm:$0x1]
    %67 = vrot.lane.b32.xlu0 %v66, 40
    %v68 = vpop.permute.xlu0 %67
    %vm69 = vcmask 392512
    %70 = vst.msk [vmem:[#allocation0] sm:$0x1] %vm69, %v68
    %s71 = scalar_lea.vmem %s0, 4
    %v72 = vld [vmem:[%s71] sm:$0x1]
    %73 = vrot.lane.b32.xlu0 %v72, 32
    %v74 = vpop.permute.xlu0 %73
    %vm75 = vcmask 326912
    %76 = vst.msk [vmem:[#allocation0] sm:$0x1] %vm75, %v74
    %s77 = scalar_lea.vmem %s0, 3
    %v78 = vld [vmem:[%s77] sm:$0x1]
    %79 = vrot.lane.b32.xlu0 %v78, 24
    %v80 = vpop.permute.xlu0 %79
    %vm81 = vcmask 261312
    %82 = vst.msk [vmem:[#allocation0] sm:$0x1] %vm81, %v80
    %s83 = scalar_lea.vmem %s0, 2
    %v84 = vld [vmem:[%s83] sm:$0x1]
    %85 = vrot.lane.b32.xlu0 %v84, 16
    %v86 = vpop.permute.xlu0 %85
    %vm87 = vcmask 195712
    %88 = vst.msk [vmem:[#allocation0] sm:$0x1] %vm87, %v86
    %s89 = scalar_lea.vmem %s0, 1
    %v90 = vld [vmem:[%s89] sm:$0x1]
    %91 = vrot.lane.b32.xlu0 %v90, 8
    %v92 = vpop.permute.xlu0 %91
    %vm93 = vcmask 130112
    %94 = vst.msk [vmem:[#allocation0] sm:$0x1] %vm93, %v92
    %s96 = sshllo.u32 0, 1
    %v98 = vld [vmem:[#allocation0] sm:%s96]
    %s99 = sshllo.u32 0, 1
    %100 = vst [vmem:[%s1] sm:%s99] %v98

// kernel: conv_block_forward.1
$region0: #{conv_block_forward.1}
  #allocation0 [shape = 'u32[]', space=smem, size = 0x4, offset = 0x4, fixed_abs, tag = 'smem constant byte address 0x4 - core index']
  #allocation1 [shape = 'u32[144,128]{1,0:T(1,128)}', space=vmem, size = 0x12000, scoped, tag = 'internal scratch']
  #allocation2 [shape = 'f32[2,18,64]{2,1,0:T(8,128)}', space=vmem, size = 0x6000, scoped, tag = 'scratch operand']
  #allocation3 [shape = 'f32[2,18,128]{2,1,0:T(8,128)}', space=vmem, size = 0x6000, scoped, tag = 'scratch operand']
  %s0 = inlined_call_operand.vmem [shape: f32[2,16,64], index: 0, kind: input, shape index: {}]
  %s1 = inlined_call_operand.vmem [shape: f32[192,128], index: 1, kind: input, shape index: {}]
  %s2 = inlined_call_operand.vmem [shape: f32[1,128], index: 2, kind: input, shape index: {}]
  %s3 = inlined_call_operand.vmem [shape: f32[1,128], index: 3, kind: input, shape index: {}]
  %s4 = inlined_call_operand.vmem [shape: f32[384,128], index: 4, kind: input, shape index: {}]
  %s5 = inlined_call_operand.vmem [shape: f32[1,128], index: 5, kind: input, shape index: {}]
  %s6 = inlined_call_operand.vmem [shape: f32[1,128], index: 6, kind: input, shape index: {}]
  %s7 = inlined_call_operand.vmem [shape: f32[128,128], index: 7, kind: input, shape index: {}]
  %s8 = inlined_call_operand.vmem [shape: f32[32,128], index: 8, kind: output, shape index: {}]
  %s9 = sld [smem:[#allocation0]]
  $region42: #{conv_block_forward.1} parent=0
    _
  %s11 = ssub.s32 1, %s9
  %s12 = scalar_select 0, %s11, %s9
  // Predicated region
  $region2: #{conv_block_forward.1} parent=0 // pred_check
    _
  $region3: #{conv_block_forward.1} parent=0 // pred_check_branch
    %14 = sbr.rel (0) target = $region5
  $region4: #{conv_block_forward.1} parent=0 // pred_region
    _
  $region5: #{conv_block_forward.1} parent=0 // pred_fallthru
    _
  // Predicated region
  $region6: #{conv_block_forward.1} parent=0 // pred_check
    _
  $region7: #{conv_block_forward.1} parent=0 // pred_check_branch
    %16 = sbr.rel (0) target = $region9
  $region8: #{conv_block_forward.1} parent=0 // pred_region
    _
  $region9: #{conv_block_forward.1} parent=0 // pred_fallthru
    _
  // Predicated region
  $region10: #{conv_block_forward.1} parent=0 // pred_check
    _
  $region11: #{conv_block_forward.1} parent=0 // pred_check_branch
    %18 = sbr.rel (0) target = $region13
  $region12: #{conv_block_forward.1} parent=0 // pred_region
    _
  $region13: #{conv_block_forward.1} parent=0 // pred_fallthru
    _
  // Predicated region
  $region14: #{conv_block_forward.1} parent=0 // pred_check
    _
  $region15: #{conv_block_forward.1} parent=0 // pred_check_branch
    %20 = sbr.rel (0) target = $region17
  $region16: #{conv_block_forward.1} parent=0 // pred_region
    _
  $region17: #{conv_block_forward.1} parent=0 // pred_fallthru
    _
  // Predicated region
  $region18: #{conv_block_forward.1} parent=0 // pred_check
    _
  $region19: #{conv_block_forward.1} parent=0 // pred_check_branch
    %22 = sbr.rel (0) target = $region21
  $region20: #{conv_block_forward.1} parent=0 // pred_region
    _
  $region21: #{conv_block_forward.1} parent=0 // pred_fallthru
    _
  // Predicated region
  $region22: #{conv_block_forward.1} parent=0 // pred_check
    _
  $region23: #{conv_block_forward.1} parent=0 // pred_check_branch
    %24 = sbr.rel (0) target = $region25
  $region24: #{conv_block_forward.1} parent=0 // pred_region
    _
  $region25: #{conv_block_forward.1} parent=0 // pred_fallthru
    _
  // Predicated region
  $region26: #{conv_block_forward.1} parent=0 // pred_check
    _
  $region27: #{conv_block_forward.1} parent=0 // pred_check_branch
    %26 = sbr.rel (0) target = $region29
  $region28: #{conv_block_forward.1} parent=0 // pred_region
    _
  $region29: #{conv_block_forward.1} parent=0 // pred_fallthru
    _
  // Predicated region
  $region30: #{conv_block_forward.1} parent=0 // pred_check
    _
  $region31: #{conv_block_forward.1} parent=0 // pred_check_branch
    %28 = sbr.rel (0) target = $region33
  $region32: #{conv_block_forward.1} parent=0 // pred_region
    _
  $region33: #{conv_block_forward.1} parent=0 // pred_fallthru
    _
  %vm29 = vcmask 516096
  %30 = vst.msk [vmem:[#allocation2] sm:$0x1] %vm29, 0.0
  %31 = vst.msk [vmem:[#allocation2 + $0x18] sm:$0x1] %vm29, 0.0
  %32 = vst.msk [vmem:[#allocation2 + $0x11] sm:$0x1] %vm29, 0.0
  %33 = vst.msk [vmem:[#allocation2 + $0x29] sm:$0x1] %vm29, 0.0
  %v34 = vld [vmem:[%s0] sm:$0xff]
  %v35 = vld [vmem:[%s0 + $0x8] sm:$0xff]
  %v36 = vld [vmem:[%s0 + $0x10] sm:$0xff]
  %v37 = vld [vmem:[%s0 + $0x18] sm:$0xff]
  %vm38 = vcmask 523264
  %39 = vst.msk [vmem:[#allocation2 + $0x1] sm:$0xff] %vm38, %v34
  %40 = vst.msk [vmem:[#allocation2 + $0x9] sm:$0xff] %vm38, %v35
  %41 = vst.msk [vmem:[#allocation2 + $0x19] sm:$0xff] %vm38, %v36
  %42 = vst.msk [vmem:[#allocation2 + $0x21] sm:$0xff] %vm38, %v37
  %v43 = vld [vmem:[#allocation2] sm:$0xff]
  %v44 = vld [vmem:[#allocation2 + $0x8] sm:$0xff]
  %v45 = vld [vmem:[#allocation2 + $0x18] sm:$0xff]
  %v46 = vld [vmem:[#allocation2 + $0x20] sm:$0xff]
  %v47 = vld [vmem:[#allocation2 + $0x1] sm:$0xff]
  %v48 = vld [vmem:[#allocation2 + $0x9] sm:$0xff]
  %v49 = vld [vmem:[#allocation2 + $0x19] sm:$0xff]
  %v50 = vld [vmem:[#allocation2 + $0x21] sm:$0xff]
  %v51 = vld [vmem:[#allocation2 + $0x2] sm:$0xff]
  %v52 = vld [vmem:[#allocation2 + $0xa] sm:$0xff]
  %v53 = vld [vmem:[#allocation2 + $0x1a] sm:$0xff]
  %v54 = vld [vmem:[#allocation2 + $0x22] sm:$0xff]
  %59 = vrot.lane.b32.xlu0 %v47, 64
  %v60 = vpop.permute.xlu0 %59
  %61 = vrot.lane.b32.xlu0 %v48, 64
  %v62 = vpop.permute.xlu0 %61
  %63 = vrot.lane.b32.xlu0 %v49, 64
  %v64 = vpop.permute.xlu0 %63
  %65 = vrot.lane.b32.xlu0 %v50, 64
  %v66 = vpop.permute.xlu0 %65
  %v71 = vsel %vm38, %v43, %v60
  %v72 = vsel %vm38, %v44, %v62
  %v73 = vsel %vm38, %v45, %v64
  %v74 = vsel %vm38, %v46, %v66
  %v75 = vld [vmem:[%s1] sm:$0xff]
  %v76 = vld [vmem:[%s1 + $0x8] sm:$0xff]
  %v77 = vld [vmem:[%s1 + $0x10] sm:$0xff]
  %v78 = vld [vmem:[%s1 + $0x18] sm:$0xff]
  %v79 = vld [vmem:[%s1 + $0x20] sm:$0xff]
  %v80 = vld [vmem:[%s1 + $0x28] sm:$0xff]
  %v81 = vld [vmem:[%s1 + $0x30] sm:$0xff]
  %v82 = vld [vmem:[%s1 + $0x38] sm:$0xff]
  %v83 = vld [vmem:[%s1 + $0x40] sm:$0xff]
  %v84 = vld [vmem:[%s1 + $0x48] sm:$0xff]
  %v85 = vld [vmem:[%s1 + $0x50] sm:$0xff]
  %v86 = vld [vmem:[%s1 + $0x58] sm:$0xff]
  %v87 = vld [vmem:[%s1 + $0x60] sm:$0xff]
  %v88 = vld [vmem:[%s1 + $0x68] sm:$0xff]
  %v89 = vld [vmem:[%s1 + $0x70] sm:$0xff]
  %v90 = vld [vmem:[%s1 + $0x78] sm:$0xff]
  %v91 = vld [vmem:[%s1 + $0x80] sm:$0xff]
  %v92 = vld [vmem:[%s1 + $0x88] sm:$0xff]
  %v93 = vld [vmem:[%s1 + $0x90] sm:$0xff]
  %v94 = vld [vmem:[%s1 + $0x98] sm:$0xff]
  %v95 = vld [vmem:[%s1 + $0xa0] sm:$0xff]
  %v96 = vld [vmem:[%s1 + $0xa8] sm:$0xff]
  %v97 = vld [vmem:[%s1 + $0xb0] sm:$0xff]
  %v98 = vld [vmem:[%s1 + $0xb8] sm:$0xff]
  %v100 = vsel %vm38, %v51, 0
  %v103 = vsel %vm38, %v52, 0
  %v106 = vsel %vm38, %v53, 0
  %v109 = vsel %vm38, %v54, 0
  %111 = vmatprep.subr.mxu0 0.0
  %112 = vmatpush1.msra.mxu0 %v75
  %113 = vmatprep.subr.mxu0 0.0
  %114 = vmatpush1.msra.mxu0 %v76
  %115 = vmatprep.subr.mxu0 0.0
  %116 = vmatpush1.msra.mxu0 %v77
  %117 = vmatprep.subr.mxu0 0.0
  %118 = vmatpush1.msra.mxu0 %v78
  %119 = vmatprep.subr.mxu0 0.0
  %120 = vmatpush1.msra.mxu0 %v79
  %121 = vmatprep.subr.mxu0 0.0
  %122 = vmatpush1.msra.mxu0 %v80
  %123 = vmatprep.subr.mxu0 0.0
  %124 = vmatpush1.msra.mxu0 %v81
  %125 = vmatprep.subr.mxu0 0.0
  %126 = vmatpush1.msra.mxu0 %v82
  %127 = vmatprep.subr.mxu0 0.0
  %128 = vmatpush1.msra.mxu0 %v83
  %129 = vmatprep.subr.mxu0 0.0
  %130 = vmatpush1.msra.mxu0 %v84
  %131 = vmatprep.subr.mxu0 0.0
  %132 = vmatpush1.msra.mxu0 %v85
  %133 = vmatprep.subr.mxu0 0.0
  %134 = vmatpush1.msra.mxu0 %v86
  %135 = vmatprep.subr.mxu0 0.0
  %136 = vmatpush1.msra.mxu0 %v87
  %137 = vmatprep.subr.mxu0 0.0
  %138 = vmatpush1.msra.mxu0 %v88
  %139 = vmatprep.subr.mxu0 0.0
  %140 = vmatpush1.msra.mxu0 %v89
  %141 = vmatprep.subr.mxu0 0.0
  %142 = vmatpush1.msra.mxu0 %v90
  %143 = vmatprep.subr.mxu0 0.0
  %144 = vmatpush1.msra.mxu0 %v91
  %145 = vmatprep.subr.mxu0 0.0
  %146 = vmatpush1.msra.mxu0 %v92
  %147 = vmatprep.subr.mxu0 0.0
  %148 = vmatpush1.msra.mxu0 %v93
  %149 = vmatprep.subr.mxu0 0.0
  %150 = vmatpush1.msra.mxu0 %v94
  %151 = vmatprep.subr.mxu0 0.0
  %152 = vmatpush1.msra.mxu0 %v95
  %153 = vmatprep.subr.mxu0 0.0
  %154 = vmatpush1.msra.mxu0 %v96
  %155 = vmatprep.subr.mxu0 0.0
  %156 = vmatpush1.msra.mxu0 %v97
  %157 = vmatprep.subr.mxu0 0.0
  %158 = vmatpush1.msra.mxu0 %v98
  %159 = vmatprep.subr.mxu0 0.0
  %160 = vmatpush1.msra.mxu0 0.0
  %161 = vmatprep.subr.mxu0 0.0
  %162 = vmatpush1.msra.mxu0 0.0
  %163 = vmatprep.subr.mxu0 0.0
  %164 = vmatpush1.msra.mxu0 0.0
  %165 = vmatprep.subr.mxu0 0.0
  %166 = vmatpush1.msra.mxu0 0.0
  %167 = vmatprep.subr.mxu0 0.0
  %168 = vmatpush1.msra.mxu0 0.0
  %169 = vmatprep.subr.mxu0 0.0
  %170 = vmatpush1.msra.mxu0 0.0
  %171 = vmatprep.subr.mxu0 0.0
  %172 = vmatpush1.msra.mxu0 0.0
  %173 = vmatprep.subr.mxu0 0.0
  %174 = vmatpush1.msra.mxu0 0.0
  %175 = vmatprep.mubr.f32.mxu0 %v100
  %176 = vmatmul.mubr.f32.gmra.mrb[0].mxu0 %v71
  %v177 = vpop.f32.mrb[0].mxu0
  %v178 = vadd.f32 0.0, %v177
  %v179 = vpop.f32.mrb[0].mxu0
  %180 = vmatprep.mubr.f32.mxu0 %v103
  %181 = vmatmul.mubr.f32.gmra.mrb[0].mxu0 %v72
  %v182 = vpop.f32.mrb[0].mxu0
  %v183 = vadd.f32 0.0, %v182
  %v184 = vpop.f32.mrb[0].mxu0
  %185 = vmatprep.mubr.f32.mxu0 %v106
  %186 = vmatmul.mubr.f32.gmra.mrb[0].mxu0 %v73
  %v187 = vpop.f32.mrb[0].mxu0
  %v188 = vadd.f32 0.0, %v187
  %v189 = vpop.f32.mrb[0].mxu0
  %190 = vmatprep.mubr.f32.mxu0 %v109
  %191 = vmatmul.mubr.f32.gmra.mrb[0].mxu0 %v74
  %v192 = vpop.f32.mrb[0].mxu0
  %v193 = vadd.f32 0.0, %v192
  %v194 = vpop.f32.mrb[0].mxu0
  %195 = vdwg.mxu0
  %v196 = vld [vmem:[%s2] sm:$0x1]
  %v197 = vld [vmem:[%s3] sm:$0x1]
  %v198 = vadd.f32 %v178, %v183
  %v199 = vadd.f32 %v198, %v188
  %v200 = vadd.f32 %v199, %v193
  %v201 = vrot.slane %v200, 4
  %v202 = vadd.f32 %v200, %v201
  %v203 = vrot.slane %v202, 2
  %v204 = vadd.f32 %v202, %v203
  %v205 = vrot.slane %v204, 1
  %v206 = vadd.f32 %v204, %v205
  %v207 = vmul.f32 %v178, %v178
  %v208 = vmul.f32 %v183, %v183
  %v209 = vmul.f32 %v188, %v188
  %v210 = vmul.f32 %v193, %v193
  %v211 = vadd.f32 %v207, %v208
  %v212 = vadd.f32 %v211, %v209
  %v213 = vadd.f32 %v212, %v210
  %v214 = vrot.slane %v213, 4
  %v215 = vadd.f32 %v213, %v214
  %v216 = vrot.slane %v215, 2
  %v217 = vadd.f32 %v215, %v216
  %v218 = vrot.slane %v217, 1
  %v219 = vadd.f32 %v217, %v218
  %vm220 = vcmask 1040384
  %v221 = vsel %vm220, %v206, %v219
  %v222 = vld [vmem:[%s7] sm:$0xff]
  %v223 = vld [vmem:[%s7 + $0x8] sm:$0xff]
  %v224 = vld [vmem:[%s7 + $0x10] sm:$0xff]
  %v225 = vld [vmem:[%s7 + $0x18] sm:$0xff]
  %v226 = vld [vmem:[%s7 + $0x20] sm:$0xff]
  %v227 = vld [vmem:[%s7 + $0x28] sm:$0xff]
  %v228 = vld [vmem:[%s7 + $0x30] sm:$0xff]
  %v229 = vld [vmem:[%s7 + $0x38] sm:$0xff]
  %v230 = vld [vmem:[%s7 + $0x40] sm:$0xff]
  %v231 = vld [vmem:[%s7 + $0x48] sm:$0xff]
  %v232 = vld [vmem:[%s7 + $0x50] sm:$0xff]
  %v233 = vld [vmem:[%s7 + $0x58] sm:$0xff]
  %v234 = vld [vmem:[%s7 + $0x60] sm:$0xff]
  %v235 = vld [vmem:[%s7 + $0x68] sm:$0xff]
  %v236 = vld [vmem:[%s7 + $0x70] sm:$0xff]
  %v237 = vld [vmem:[%s7 + $0x78] sm:$0xff]
  %238 = vmatprep.subr.mxu0 0.0
  %239 = vmatpush1.msra.mxu0 %v222
  %240 = vmatprep.subr.mxu0 0.0
  %241 = vmatpush1.msra.mxu0 %v223
  %242 = vmatprep.subr.mxu0 0.0
  %243 = vmatpush1.msra.mxu0 %v224
  %244 = vmatprep.subr.mxu0 0.0
  %245 = vmatpush1.msra.mxu0 %v225
  %246 = vmatprep.subr.mxu0 0.0
  %247 = vmatpush1.msra.mxu0 %v226
  %248 = vmatprep.subr.mxu0 0.0
  %249 = vmatpush1.msra.mxu0 %v227
  %250 = vmatprep.subr.mxu0 0.0
  %251 = vmatpush1.msra.mxu0 %v228
  %252 = vmatprep.subr.mxu0 0.0
  %253 = vmatpush1.msra.mxu0 %v229
  %254 = vmatprep.subr.mxu0 0.0
  %255 = vmatpush1.msra.mxu0 %v230
  %256 = vmatprep.subr.mxu0 0.0
  %257 = vmatpush1.msra.mxu0 %v231
  %258 = vmatprep.subr.mxu0 0.0
  %259 = vmatpush1.msra.mxu0 %v232
  %260 = vmatprep.subr.mxu0 0.0
  %261 = vmatpush1.msra.mxu0 %v233
  %262 = vmatprep.subr.mxu0 0.0
  %263 = vmatpush1.msra.mxu0 %v234
  %264 = vmatprep.subr.mxu0 0.0
  %265 = vmatpush1.msra.mxu0 %v235
  %266 = vmatprep.subr.mxu0 0.0
  %267 = vmatpush1.msra.mxu0 %v236
  %268 = vmatprep.subr.mxu0 0.0
  %269 = vmatpush1.msra.mxu0 %v237
  %270 = vmatprep.subr.mxu0 0.0
  %271 = vmatpush1.msra.mxu0 0.0
  %272 = vmatprep.subr.mxu0 0.0
  %273 = vmatpush1.msra.mxu0 0.0
  %274 = vmatprep.subr.mxu0 0.0
  %275 = vmatpush1.msra.mxu0 0.0
  %276 = vmatprep.subr.mxu0 0.0
  %277 = vmatpush1.msra.mxu0 0.0
  %278 = vmatprep.subr.mxu0 0.0
  %279 = vmatpush1.msra.mxu0 0.0
  %280 = vmatprep.subr.mxu0 0.0
  %281 = vmatpush1.msra.mxu0 0.0
  %282 = vmatprep.subr.mxu0 0.0
  %283 = vmatpush1.msra.mxu0 0.0
  %284 = vmatprep.subr.mxu0 0.0
  %285 = vmatpush1.msra.mxu0 0.0
  %286 = vmatprep.subr.mxu0 0.0
  %287 = vmatpush1.msra.mxu0 0.0
  %288 = vmatprep.subr.mxu0 0.0
  %289 = vmatpush1.msra.mxu0 0.0
  %290 = vmatprep.subr.mxu0 0.0
  %291 = vmatpush1.msra.mxu0 0.0
  %292 = vmatprep.subr.mxu0 0.0
  %293 = vmatpush1.msra.mxu0 0.0
  %294 = vmatprep.subr.mxu0 0.0
  %295 = vmatpush1.msra.mxu0 0.0
  %296 = vmatprep.subr.mxu0 0.0
  %297 = vmatpush1.msra.mxu0 0.0
  %298 = vmatprep.subr.mxu0 0.0
  %299 = vmatpush1.msra.mxu0 0.0
  %300 = vmatprep.subr.mxu0 0.0
  %301 = vmatpush1.msra.mxu0 0.0
  %302 = vmatprep.mubr.f32.mxu0 0.0
  %303 = vmatmul.mubr.f32.gmra.mrb[0].mxu0 %v221
  %v304 = vpop.f32.mrb[0].mxu0
  %v305 = vadd.f32 0.0, %v304
  %v306 = vpop.f32.mrb[0].mxu0
  %307 = vdwg.mxu0
  %v308 = vmul.f32 %v305, %v305
  %v310 = vrot.slane %v308, 7
  %v312 = vsub.f32 %v305, %v310
  %v313 = vadd.f32 %v312, 1e-05
  %v314 = vrsqrt.pop %v313
  %v317 = vunpack.c.l.s4 1966171168
  %v318 = vunpack.c.0.s8 %v317
  %v319 = vlaneseq
  %v320 = vshrl.u32 %v319, 7
  %v321 = vsub.s32 %v318, %v320
  %v322 = vrot.slane %v314, %v321
  %v323 = vcombine.high %v322, %v322
  %v325 = vunpack.c.l.s4 1966171168
  %v326 = vunpack.c.0.s8 %v325
  %v327 = vlaneseq
  %v328 = vshrl.u32 %v327, 7
  %v329 = vsub.s32 %v326, %v328
  %v330 = vrot.slane %v323, %v329
  %v332 = vmul.f32 %v196, %v330
  %v333 = vmul.f32 %v305, %v332
  %v334 = vsub.f32 %v197, %v333
  %v336 = vlaneseq
  %v337 = vshrl.u32 %v336, 7
  %v338 = vsub.s32 0, %v337
  %v339 = vrot.slane %v332, %v338
  %v341 = vmul.f32 %v178, %v339
  %v342 = vmul.f32 %v183, %v339
  %v343 = vmul.f32 %v188, %v339
  %v344 = vmul.f32 %v193, %v339
  %v346 = vlaneseq
  %v347 = vshrl.u32 %v346, 7
  %v348 = vsub.s32 0, %v347
  %v349 = vrot.slane %v334, %v348
  %v351 = vadd.f32 %v341, %v349
  %v352 = vadd.f32 %v342, %v349
  %v353 = vadd.f32 %v343, %v349
  %v354 = vadd.f32 %v344, %v349
  %v355 = vmax.f32 %v351, 0.0
  %v356 = vmax.f32 %v352, 0.0
  %v357 = vmax.f32 %v353, 0.0
  %v358 = vmax.f32 %v354, 0.0
  %359 = vst [vmem:[#allocation3] sm:$0x1] 0.0
  %360 = vst [vmem:[#allocation3 + $0x18] sm:$0x1] 0.0
  %361 = vst [vmem:[#allocation3 + $0x11] sm:$0x1] 0.0
  %362 = vst [vmem:[#allocation3 + $0x29] sm:$0x1] 0.0
  %363 = vst [vmem:[#allocation3 + $0x1] sm:$0xff] %v355
  %364 = vst [vmem:[#allocation3 + $0x9] sm:$0xff] %v356
  %365 = vst [vmem:[#allocation3 + $0x19] sm:$0xff] %v357
  %366 = vst [vmem:[#allocation3 + $0x21] sm:$0xff] %v358
  %v367 = vld [vmem:[#allocation3] sm:$0xff]
  %v368 = vld [vmem:[#allocation3 + $0x8] sm:$0xff]
  %v369 = vld [vmem:[#allocation3 + $0x18] sm:$0xff]
  %v370 = vld [vmem:[#allocation3 + $0x20] sm:$0xff]
  %v371 = vld [vmem:[#allocation3 + $0x1] sm:$0xff]
  %v372 = vld [vmem:[#allocation3 + $0x9] sm:$0xff]
  %v373 = vld [vmem:[#allocation3 + $0x19] sm:$0xff]
  %v374 = vld [vmem:[#allocation3 + $0x21] sm:$0xff]
  %v375 = vld [vmem:[#allocation3 + $0x2] sm:$0xff]
  %v376 = vld [vmem:[#allocation3 + $0xa] sm:$0xff]
  %v377 = vld [vmem:[#allocation3 + $0x1a] sm:$0xff]
  %v378 = vld [vmem:[#allocation3 + $0x22] sm:$0xff]
  %v379 = vld [vmem:[%s4] sm:$0xff]
  %v380 = vld [vmem:[%s4 + $0x8] sm:$0xff]
  %v381 = vld [vmem:[%s4 + $0x10] sm:$0xff]
  %v382 = vld [vmem:[%s4 + $0x18] sm:$0xff]
  %v383 = vld [vmem:[%s4 + $0x20] sm:$0xff]
  %v384 = vld [vmem:[%s4 + $0x28] sm:$0xff]
  %v385 = vld [vmem:[%s4 + $0x30] sm:$0xff]
  %v386 = vld [vmem:[%s4 + $0x38] sm:$0xff]
  %v387 = vld [vmem:[%s4 + $0x40] sm:$0xff]
  %v388 = vld [vmem:[%s4 + $0x48] sm:$0xff]
  %v389 = vld [vmem:[%s4 + $0x50] sm:$0xff]
  %v390 = vld [vmem:[%s4 + $0x58] sm:$0xff]
  %v391 = vld [vmem:[%s4 + $0x60] sm:$0xff]
  %v392 = vld [vmem:[%s4 + $0x68] sm:$0xff]
  %v393 = vld [vmem:[%s4 + $0x70] sm:$0xff]
  %v394 = vld [vmem:[%s4 + $0x78] sm:$0xff]
  %v395 = vld [vmem:[%s4 + $0x80] sm:$0xff]
  %v396 = vld [vmem:[%s4 + $0x88] sm:$0xff]
  %v397 = vld [vmem:[%s4 + $0x90] sm:$0xff]
  %v398 = vld [vmem:[%s4 + $0x98] sm:$0xff]
  %v399 = vld [vmem:[%s4 + $0xa0] sm:$0xff]
  %v400 = vld [vmem:[%s4 + $0xa8] sm:$0xff]
  %v401 = vld [vmem:[%s4 + $0xb0] sm:$0xff]
  %v402 = vld [vmem:[%s4 + $0xb8] sm:$0xff]
  %v403 = vld [vmem:[%s4 + $0xc0] sm:$0xff]
  %v404 = vld [vmem:[%s4 + $0xc8] sm:$0xff]
  %v405 = vld [vmem:[%s4 + $0xd0] sm:$0xff]
  %v406 = vld [vmem:[%s4 + $0xd8] sm:$0xff]
  %v407 = vld [vmem:[%s4 + $0xe0] sm:$0xff]
  %v408 = vld [vmem:[%s4 + $0xe8] sm:$0xff]
  %v409 = vld [vmem:[%s4 + $0xf0] sm:$0xff]
  %v410 = vld [vmem:[%s4 + $0xf8] sm:$0xff]
  %v411 = vld [vmem:[%s4 + $0x100] sm:$0xff]
  %v412 = vld [vmem:[%s4 + $0x108] sm:$0xff]
  %v413 = vld [vmem:[%s4 + $0x110] sm:$0xff]
  %v414 = vld [vmem:[%s4 + $0x118] sm:$0xff]
  %v415 = vld [vmem:[%s4 + $0x120] sm:$0xff]
  %v416 = vld [vmem:[%s4 + $0x128] sm:$0xff]
  %v417 = vld [vmem:[%s4 + $0x130] sm:$0xff]
  %v418 = vld [vmem:[%s4 + $0x138] sm:$0xff]
  %v419 = vld [vmem:[%s4 + $0x140] sm:$0xff]
  %v420 = vld [vmem:[%s4 + $0x148] sm:$0xff]
  %v421 = vld [vmem:[%s4 + $0x150] sm:$0xff]
  %v422 = vld [vmem:[%s4 + $0x158] sm:$0xff]
  %v423 = vld [vmem:[%s4 + $0x160] sm:$0xff]
  %v424 = vld [vmem:[%s4 + $0x168] sm:$0xff]
  %v425 = vld [vmem:[%s4 + $0x170] sm:$0xff]
  %v426 = vld [vmem:[%s4 + $0x178] sm:$0xff]
  %427 = vmatprep.subr.mxu0 0.0
  %428 = vmatpush1.msra.mxu0 %v379
  %429 = vmatprep.subr.mxu0 0.0
  %430 = vmatpush1.msra.mxu0 %v380
  %431 = vmatprep.subr.mxu0 0.0
  %432 = vmatpush1.msra.mxu0 %v381
  %433 = vmatprep.subr.mxu0 0.0
  %434 = vmatpush1.msra.mxu0 %v382
  %435 = vmatprep.subr.mxu0 0.0
  %436 = vmatpush1.msra.mxu0 %v383
  %437 = vmatprep.subr.mxu0 0.0
  %438 = vmatpush1.msra.mxu0 %v384
  %439 = vmatprep.subr.mxu0 0.0
  %440 = vmatpush1.msra.mxu0 %v385
  %441 = vmatprep.subr.mxu0 0.0
  %442 = vmatpush1.msra.mxu0 %v386
  %443 = vmatprep.subr.mxu0 0.0
  %444 = vmatpush1.msra.mxu0 %v387
  %445 = vmatprep.subr.mxu0 0.0
  %446 = vmatpush1.msra.mxu0 %v388
  %447 = vmatprep.subr.mxu0 0.0
  %448 = vmatpush1.msra.mxu0 %v389
  %449 = vmatprep.subr.mxu0 0.0
  %450 = vmatpush1.msra.mxu0 %v390
  %451 = vmatprep.subr.mxu0 0.0
  %452 = vmatpush1.msra.mxu0 %v391
  %453 = vmatprep.subr.mxu0 0.0
  %454 = vmatpush1.msra.mxu0 %v392
  %455 = vmatprep.subr.mxu0 0.0
  %456 = vmatpush1.msra.mxu0 %v393
  %457 = vmatprep.subr.mxu0 0.0
  %458 = vmatpush1.msra.mxu0 %v394
  %459 = vmatprep.subr.mxu0 0.0
  %460 = vmatpush1.msra.mxu0 %v395
  %461 = vmatprep.subr.mxu0 0.0
  %462 = vmatpush1.msra.mxu0 %v396
  %463 = vmatprep.subr.mxu0 0.0
  %464 = vmatpush1.msra.mxu0 %v397
  %465 = vmatprep.subr.mxu0 0.0
  %466 = vmatpush1.msra.mxu0 %v398
  %467 = vmatprep.subr.mxu0 0.0
  %468 = vmatpush1.msra.mxu0 %v399
  %469 = vmatprep.subr.mxu0 0.0
  %470 = vmatpush1.msra.mxu0 %v400
  %471 = vmatprep.subr.mxu0 0.0
  %472 = vmatpush1.msra.mxu0 %v401
  %473 = vmatprep.subr.mxu0 0.0
  %474 = vmatpush1.msra.mxu0 %v402
  %475 = vmatprep.subr.mxu0 0.0
  %476 = vmatpush1.msra.mxu0 %v403
  %477 = vmatprep.subr.mxu0 0.0
  %478 = vmatpush1.msra.mxu0 %v404
  %479 = vmatprep.subr.mxu0 0.0
  %480 = vmatpush1.msra.mxu0 %v405
  %481 = vmatprep.subr.mxu0 0.0
  %482 = vmatpush1.msra.mxu0 %v406
  %483 = vmatprep.subr.mxu0 0.0
  %484 = vmatpush1.msra.mxu0 %v407
  %485 = vmatprep.subr.mxu0 0.0
  %486 = vmatpush1.msra.mxu0 %v408
  %487 = vmatprep.subr.mxu0 0.0
  %488 = vmatpush1.msra.mxu0 %v409
  %489 = vmatprep.subr.mxu0 0.0
  %490 = vmatpush1.msra.mxu0 %v410
  %491 = vmatprep.mubr.f32.mxu0 %v371
  %492 = vmatmul.mubr.f32.gmra.mrb[0].mxu0 %v367
  %v493 = vpop.f32.mrb[0].mxu0
  %v494 = vadd.f32 0.0, %v493
  %v495 = vpop.f32.mrb[0].mxu0
  %496 = vmatprep.mubr.f32.mxu0 %v372
  %497 = vmatmul.mubr.f32.gmra.mrb[0].mxu0 %v368
  %v498 = vpop.f32.mrb[0].mxu0
  %v499 = vadd.f32 0.0, %v498
  %v500 = vpop.f32.mrb[0].mxu0
  %501 = vmatprep.mubr.f32.mxu0 %v373
  %502 = vmatmul.mubr.f32.gmra.mrb[0].mxu0 %v369
  %v503 = vpop.f32.mrb[0].mxu0
  %v504 = vadd.f32 0.0, %v503
  %v505 = vpop.f32.mrb[0].mxu0
  %506 = vmatprep.mubr.f32.mxu0 %v374
  %507 = vmatmul.mubr.f32.gmra.mrb[0].mxu0 %v370
  %v508 = vpop.f32.mrb[0].mxu0
  %v509 = vadd.f32 0.0, %v508
  %v510 = vpop.f32.mrb[0].mxu0
  %511 = vdwg.mxu0
  %512 = vmatprep.subr.mxu0 0.0
  %513 = vmatpush1.msra.mxu0 %v411
  %514 = vmatprep.subr.mxu0 0.0
  %515 = vmatpush1.msra.mxu0 %v412
  %516 = vmatprep.subr.mxu0 0.0
  %517 = vmatpush1.msra.mxu0 %v413
  %518 = vmatprep.subr.mxu0 0.0
  %519 = vmatpush1.msra.mxu0 %v414
  %520 = vmatprep.subr.mxu0 0.0
  %521 = vmatpush1.msra.mxu0 %v415
  %522 = vmatprep.subr.mxu0 0.0
  %523 = vmatpush1.msra.mxu0 %v416
  %524 = vmatprep.subr.mxu0 0.0
  %525 = vmatpush1.msra.mxu0 %v417
  %526 = vmatprep.subr.mxu0 0.0
  %527 = vmatpush1.msra.mxu0 %v418
  %528 = vmatprep.subr.mxu0 0.0
  %529 = vmatpush1.msra.mxu0 %v419
  %530 = vmatprep.subr.mxu0 0.0
  %531 = vmatpush1.msra.mxu0 %v420
  %532 = vmatprep.subr.mxu0 0.0
  %533 = vmatpush1.msra.mxu0 %v421
  %534 = vmatprep.subr.mxu0 0.0
  %535 = vmatpush1.msra.mxu0 %v422
  %536 = vmatprep.subr.mxu0 0.0
  %537 = vmatpush1.msra.mxu0 %v423
  %538 = vmatprep.subr.mxu0 0.0
  %539 = vmatpush1.msra.mxu0 %v424
  %540 = vmatprep.subr.mxu0 0.0
  %541 = vmatpush1.msra.mxu0 %v425
  %542 = vmatprep.subr.mxu0 0.0
  %543 = vmatpush1.msra.mxu0 %v426
  %544 = vmatprep.subr.mxu0 0.0
  %545 = vmatpush1.msra.mxu0 0.0
  %546 = vmatprep.subr.mxu0 0.0
  %547 = vmatpush1.msra.mxu0 0.0
  %548 = vmatprep.subr.mxu0 0.0
  %549 = vmatpush1.msra.mxu0 0.0
  %550 = vmatprep.subr.mxu0 0.0
  %551 = vmatpush1.msra.mxu0 0.0
  %552 = vmatprep.subr.mxu0 0.0
  %553 = vmatpush1.msra.mxu0 0.0
  %554 = vmatprep.subr.mxu0 0.0
  %555 = vmatpush1.msra.mxu0 0.0
  %556 = vmatprep.subr.mxu0 0.0
  %557 = vmatpush1.msra.mxu0 0.0
  %558 = vmatprep.subr.mxu0 0.0
  %559 = vmatpush1.msra.mxu0 0.0
  %560 = vmatprep.subr.mxu0 0.0
  %561 = vmatpush1.msra.mxu0 0.0
  %562 = vmatprep.subr.mxu0 0.0
  %563 = vmatpush1.msra.mxu0 0.0
  %564 = vmatprep.subr.mxu0 0.0
  %565 = vmatpush1.msra.mxu0 0.0
  %566 = vmatprep.subr.mxu0 0.0
  %567 = vmatpush1.msra.mxu0 0.0
  %568 = vmatprep.subr.mxu0 0.0
  %569 = vmatpush1.msra.mxu0 0.0
  %570 = vmatprep.subr.mxu0 0.0
  %571 = vmatpush1.msra.mxu0 0.0
  %572 = vmatprep.subr.mxu0 0.0
  %573 = vmatpush1.msra.mxu0 0.0
  %574 = vmatprep.subr.mxu0 0.0
  %575 = vmatpush1.msra.mxu0 0.0
  %576 = vmatprep.mubr.f32.mxu0 0.0
  %577 = vmatmul.mubr.f32.gmra.mrb[0].mxu0 %v375
  %v578 = vpop.f32.mrb[0].mxu0
  %v579 = vadd.f32 %v494, %v578
  %v580 = vpop.f32.mrb[0].mxu0
  %581 = vmatprep.mubr.f32.mxu0 0.0
  %582 = vmatmul.mubr.f32.gmra.mrb[0].mxu0 %v376
  %v583 = vpop.f32.mrb[0].mxu0
  %v584 = vadd.f32 %v499, %v583
  %v585 = vpop.f32.mrb[0].mxu0
  %586 = vmatprep.mubr.f32.mxu0 0.0
  %587 = vmatmul.mubr.f32.gmra.mrb[0].mxu0 %v377
  %v588 = vpop.f32.mrb[0].mxu0
  %v589 = vadd.f32 %v504, %v588
  %v590 = vpop.f32.mrb[0].mxu0
  %591 = vmatprep.mubr.f32.mxu0 0.0
  %592 = vmatmul.mubr.f32.gmra.mrb[0].mxu0 %v378
  %v593 = vpop.f32.mrb[0].mxu0
  %v594 = vadd.f32 %v509, %v593
  %v595 = vpop.f32.mrb[0].mxu0
  %596 = vdwg.mxu0
  %v597 = vld [vmem:[%s5] sm:$0x1]
  %v598 = vld [vmem:[%s6] sm:$0x1]
  %v599 = vadd.f32 %v579, %v584
  %v600 = vadd.f32 %v599, %v589
  %v601 = vadd.f32 %v600, %v594
  %v602 = vrot.slane %v601, 4
  %v603 = vadd.f32 %v601, %v602
  %v604 = vrot.slane %v603, 2
  %v605 = vadd.f32 %v603, %v604
  %v606 = vrot.slane %v605, 1
  %v607 = vadd.f32 %v605, %v606
  %v608 = vmul.f32 %v579, %v579
  %v609 = vmul.f32 %v584, %v584
  %v610 = vmul.f32 %v589, %v589
  %v611 = vmul.f32 %v594, %v594
  %v612 = vadd.f32 %v608, %v609
  %v613 = vadd.f32 %v612, %v610
  %v614 = vadd.f32 %v613, %v611
  %v615 = vrot.slane %v614, 4
  %v616 = vadd.f32 %v614, %v615
  %v617 = vrot.slane %v616, 2
  %v618 = vadd.f32 %v616, %v617
  %v619 = vrot.slane %v618, 1
  %v620 = vadd.f32 %v618, %v619
  %v621 = vsel %vm220, %v607, %v620
  %v622 = vld [vmem:[%s7] sm:$0xff]
  %v623 = vld [vmem:[%s7 + $0x8] sm:$0xff]
  %v624 = vld [vmem:[%s7 + $0x10] sm:$0xff]
  %v625 = vld [vmem:[%s7 + $0x18] sm:$0xff]
  %v626 = vld [vmem:[%s7 + $0x20] sm:$0xff]
  %v627 = vld [vmem:[%s7 + $0x28] sm:$0xff]
  %v628 = vld [vmem:[%s7 + $0x30] sm:$0xff]
  %v629 = vld [vmem:[%s7 + $0x38] sm:$0xff]
  %v630 = vld [vmem:[%s7 + $0x40] sm:$0xff]
  %v631 = vld [vmem:[%s7 + $0x48] sm:$0xff]
  %v632 = vld [vmem:[%s7 + $0x50] sm:$0xff]
  %v633 = vld [vmem:[%s7 + $0x58] sm:$0xff]
  %v634 = vld [vmem:[%s7 + $0x60] sm:$0xff]
  %v635 = vld [vmem:[%s7 + $0x68] sm:$0xff]
  %v636 = vld [vmem:[%s7 + $0x70] sm:$0xff]
  %v637 = vld [vmem:[%s7 + $0x78] sm:$0xff]
  %638 = vmatprep.subr.mxu0 0.0
  %639 = vmatpush1.msra.mxu0 %v622
  %640 = vmatprep.subr.mxu0 0.0
  %641 = vmatpush1.msra.mxu0 %v623
  %642 = vmatprep.subr.mxu0 0.0
  %643 = vmatpush1.msra.mxu0 %v624
  %644 = vmatprep.subr.mxu0 0.0
  %645 = vmatpush1.msra.mxu0 %v625
  %646 = vmatprep.subr.mxu0 0.0
  %647 = vmatpush1.msra.mxu0 %v626
  %648 = vmatprep.subr.mxu0 0.0
  %649 = vmatpush1.msra.mxu0 %v627
  %650 = vmatprep.subr.mxu0 0.0
  %651 = vmatpush1.msra.mxu0 %v628
  %652 = vmatprep.subr.mxu0 0.0
  %653 = vmatpush1.msra.mxu0 %v629
  %654 = vmatprep.subr.mxu0 0.0
  %655 = vmatpush1.msra.mxu0 %v630
  %656 = vmatprep.subr.mxu0 0.0
  %657 = vmatpush1.msra.mxu0 %v631
  %658 = vmatprep.subr.mxu0 0.0
  %659 = vmatpush1.msra.mxu0 %v632
  %660 = vmatprep.subr.mxu0 0.0
  %661 = vmatpush1.msra.mxu0 %v633
  %662 = vmatprep.subr.mxu0 0.0
  %663 = vmatpush1.msra.mxu0 %v634
  %664 = vmatprep.subr.mxu0 0.0
  %665 = vmatpush1.msra.mxu0 %v635
  %666 = vmatprep.subr.mxu0 0.0
  %667 = vmatpush1.msra.mxu0 %v636
  %668 = vmatprep.subr.mxu0 0.0
  %669 = vmatpush1.msra.mxu0 %v637
  %670 = vmatprep.subr.mxu0 0.0
  %671 = vmatpush1.msra.mxu0 0.0
  %672 = vmatprep.subr.mxu0 0.0
  %673 = vmatpush1.msra.mxu0 0.0
  %674 = vmatprep.subr.mxu0 0.0
  %675 = vmatpush1.msra.mxu0 0.0
  %676 = vmatprep.subr.mxu0 0.0
  %677 = vmatpush1.msra.mxu0 0.0
  %678 = vmatprep.subr.mxu0 0.0
  %679 = vmatpush1.msra.mxu0 0.0
  %680 = vmatprep.subr.mxu0 0.0
  %681 = vmatpush1.msra.mxu0 0.0
  %682 = vmatprep.subr.mxu0 0.0
  %683 = vmatpush1.msra.mxu0 0.0
  %684 = vmatprep.subr.mxu0 0.0
  %685 = vmatpush1.msra.mxu0 0.0
  %686 = vmatprep.subr.mxu0 0.0
  %687 = vmatpush1.msra.mxu0 0.0
  %688 = vmatprep.subr.mxu0 0.0
  %689 = vmatpush1.msra.mxu0 0.0
  %690 = vmatprep.subr.mxu0 0.0
  %691 = vmatpush1.msra.mxu0 0.0
  %692 = vmatprep.subr.mxu0 0.0
  %693 = vmatpush1.msra.mxu0 0.0
  %694 = vmatprep.subr.mxu0 0.0
  %695 = vmatpush1.msra.mxu0 0.0
  %696 = vmatprep.subr.mxu0 0.0
  %697 = vmatpush1.msra.mxu0 0.0
  %698 = vmatprep.subr.mxu0 0.0
  %699 = vmatpush1.msra.mxu0 0.0
  %700 = vmatprep.subr.mxu0 0.0
  %701 = vmatpush1.msra.mxu0 0.0
  %702 = vmatprep.mubr.f32.mxu0 0.0
  %703 = vmatmul.mubr.f32.gmra.mrb[0].mxu0 %v621
  %v704 = vpop.f32.mrb[0].mxu0
  %v705 = vadd.f32 0.0, %v704
  %v706 = vpop.f32.mrb[0].mxu0
  %707 = vdwg.mxu0
  %v708 = vmul.f32 %v705, %v705
  %v710 = vrot.slane %v708, 7
  %v712 = vsub.f32 %v705, %v710
  %v713 = vadd.f32 %v712, 1e-05
  %v714 = vrsqrt.pop %v713
  %v717 = vunpack.c.l.s4 1966171168
  %v718 = vunpack.c.0.s8 %v717
  %v719 = vlaneseq
  %v720 = vshrl.u32 %v719, 7
  %v721 = vsub.s32 %v718, %v720
  %v722 = vrot.slane %v714, %v721
  %v723 = vcombine.high %v722, %v722
  %v725 = vunpack.c.l.s4 1966171168
  %v726 = vunpack.c.0.s8 %v725
  %v727 = vlaneseq
  %v728 = vshrl.u32 %v727, 7
  %v729 = vsub.s32 %v726, %v728
  %v730 = vrot.slane %v723, %v729
  %v732 = vmul.f32 %v597, %v730
  %v733 = vmul.f32 %v705, %v732
  %v734 = vsub.f32 %v598, %v733
  %v736 = vlaneseq
  %v737 = vshrl.u32 %v736, 7
  %v738 = vsub.s32 0, %v737
  %v739 = vrot.slane %v732, %v738
  %v741 = vmul.f32 %v579, %v739
  %v742 = vmul.f32 %v584, %v739
  %v743 = vmul.f32 %v589, %v739
  %v744 = vmul.f32 %v594, %v739
  %v746 = vlaneseq
  %v747 = vshrl.u32 %v746, 7
  %v748 = vsub.s32 0, %v747
  %v749 = vrot.slane %v734, %v748
  %v751 = vadd.f32 %v741, %v749
  %v752 = vadd.f32 %v742, %v749
  %v753 = vadd.f32 %v743, %v749
  %v754 = vadd.f32 %v744, %v749
  %v755 = vmax.f32 %v751, 0.0
  %v756 = vmax.f32 %v752, 0.0
  %v757 = vmax.f32 %v753, 0.0
  %v758 = vmax.f32 %v754, 0.0
  %759 = vst [vmem:[%s8] sm:$0xff] %v755
  %760 = vst [vmem:[%s8 + $0x8] sm:$0xff] %v756
  %761 = vst [vmem:[%s8 + $0x10] sm:$0xff] %v757
  %762 = vst [vmem:[%s8 + $0x18] sm:$0xff] %v758
  // Predicated region
  $region34: #{conv_block_forward.1} parent=0 // pred_check
    _
  $region35: #{conv_block_forward.1} parent=0 // pred_check_branch
    %764 = sbr.rel (0) target = $region37
  $region36: #{conv_block_forward.1} parent=0 // pred_region
    _
  $region37: #{conv_block_forward.1} parent=0 // pred_fallthru
    _
  // Predicated region
  $region38: #{conv_block_forward.1} parent=0 // pred_check
    _
  $region39: #{conv_block_forward.1} parent=0 // pred_check_branch
    %766 = sbr.rel (0) target = $region41
  $region40: #{conv_block_forward.1} parent=0 // pred_region
    _
  $region41: #{conv_block_forward.1} parent=0 // pred_fallthru
    _

</llo_original>
